<compile_context>
chip_gen: v7x
topology: tpu7x:2x2x1
jax: 0.10.0
libtpu: 0.0.40
codegen_flags: <defaults>
</compile_context>

<pallas_src>
import functools
import math

import jax
import jax.numpy as jnp
from jax.experimental import pallas as pl
from jax.experimental.pallas import tpu as pltpu

MIDAS_SIZE = 384  # MiDaS backbone input resolution


# ------------------------------ Pallas kernel ---------------------------------

def _refine_kernel(dmin_ref, rng_ref, w1_ref, b1_ref, w2_ref, b2_ref,
                   dslab_ref, cslab_ref, out_ref, *, H, TR, W):
    """Fused refine head for one (batch, row-tile) grid step.

    normalize(depth) -> conv3x3(2->32) + ReLU -> conv3x3(32->1), all in vregs.
    dslab/cslab: (1, 1, TR+4, W) row slabs with a 2-row halo (zero rows off-image).
    """
    b = pl.program_id(0)
    t = pl.program_id(1)
    f32 = jnp.float32

    S = TR + 4    # input slab rows (2-row halo each side)
    HS = TR + 2   # conv1 output rows needed by conv2 (1-row halo each side)

    # ---- per-sample normalization scalars (SMEM) ----
    dmin = dmin_ref[b]
    rng = rng_ref[b]

    # ---- depth normalization (exact, matches torch): 1 / ((d - min)/rng + 0.14) ----
    d = dslab_ref[0, 0]                                   # (S, W), W on lanes
    dnorm = 1.0 / ((d - dmin) / rng + 0.14)

    # Rows outside the image are conv1's zero padding -> force them to 0.
    xrow = jax.lax.broadcasted_iota(jnp.int32, (S, 1), 0) + (t * TR - 2)
    dnorm = jnp.where((xrow >= 0) & (xrow < H), dnorm, 0.0)
    c0 = cslab_ref[0, 0]                                  # canny halo rows already 0

    # ---- column-shift helper (built once, reused across all taps) ----
    if W % 128 == 0:
        col = jax.lax.broadcasted_iota(jnp.int32, (1, W), 1)
        lmask = col >= 1
        rmask = col <= W - 2

        def shift3(x):
            # XLU rotate (otherwise-idle slot) + edge mask: loads/stores stay unmasked.
            xl = jnp.where(lmask, pltpu.roll(x, 1, axis=1), 0.0)       # value from j-1
            xr = jnp.where(rmask, pltpu.roll(x, W - 1, axis=1), 0.0)   # value from j+1
            return xl, x, xr
    else:
        # TODO(synk): tiny / unaligned W (the 16x16 demo) underuses the 128 lanes; a
        # lane-repacked layout would fix that but real inputs (W >= 128-multiple) don't need it.
        def shift3(x):
            z = jnp.zeros((x.shape[0], 1), f32)
            xl = jnp.concatenate([z, x[:, :W - 1]], axis=1)
            xr = jnp.concatenate([x[:, 1:], z], axis=1)
            return xl, x, xr

    xs = (shift3(dnorm), shift3(c0))                      # xs[c][kx] : (S, W)

    # conv2's zero padding: h rows outside the image must be 0.
    hrow = jax.lax.broadcasted_iota(jnp.int32, (HS, 1), 0) + (t * TR - 1)
    h_valid = (hrow >= 0) & (hrow < H)

    def oc_body(oc, acc):
        # ---- conv1 (2->32), this output channel only, rows [t*TR-1, t*TR+TR] ----
        hc = jnp.zeros((HS, W), f32)
        for c in range(2):
            for ky in range(3):
                for kx in range(3):
                    w = w1_ref[oc * 18 + c * 9 + ky * 3 + kx]       # SMEM scalar
                    hc = hc + w * xs[c][kx][ky:ky + HS, :]
        hc = jnp.maximum(hc + b1_ref[oc], 0.0)
        hc = jnp.where(h_valid, hc, 0.0)

        # ---- conv2 (32->1): channel reduction folded into the tap loop ----
        hshift = shift3(hc)
        for ky in range(3):
            for kx in range(3):
                w = w2_ref[oc * 9 + ky * 3 + kx]                    # SMEM scalar
                acc = acc + w * hshift[kx][ky:ky + TR, :]
        return acc

    acc = jax.lax.fori_loop(0, 32, oc_body, jnp.zeros((TR, W), f32))
    out_ref[0] = acc + b2_ref[0]                           # lane-dense (TR, W) store


# ------------------------------ wrappers ---------------------------------------

def _pick_row_tile(H, target=64):
    """Largest multiple-of-8 divisor of H that is <= target (and < H); else whole image."""
    if H % 8 != 0:
        return H
    best = None
    for tr in range(8, min(H - 1, target) + 1, 8):
        if H % tr == 0:
            best = tr
    return H if best is None else best


def _row_tiles_with_halo(a, TR):
    """(B, H, W) -> (B, H//TR, TR+4, W): per-tile row slabs with a 2-row zero halo."""
    B, H, W = a.shape
    nrt = H // TR
    ap = jnp.pad(a, ((0, 0), (2, 2), (0, 0)))
    idx = jnp.arange(nrt)[:, None] * TR + jnp.arange(TR + 4)[None, :]   # (nrt, TR+4)
    return ap[:, idx, :]                                                # (B, nrt, TR+4, W)


def refine_rowtiled(depth, canny, params, *, row_tile=None):
    """depth, canny: (B, H, W) f32 -> refined depth (B, H, W) f32."""
    B, H, W = depth.shape
    TR = row_tile if row_tile is not None else _pick_row_tile(H)
    nrt = H // TR

    # Per-sample normalization scalars (cheap XLA pre-pass; keeps the tiled kernel
    # single-pass and its grid fully parallel).
    dmin = jnp.min(depth, axis=(1, 2))
    rng = (jnp.max(depth, axis=(1, 2)) - dmin) + 1e-6

    d_tiles = _row_tiles_with_halo(depth, TR)
    c_tiles = _row_tiles_with_halo(canny, TR)

    smem = pl.BlockSpec(memory_space=pltpu.MemorySpace.SMEM)
    kernel = functools.partial(_refine_kernel, H=H, TR=TR, W=W)

    # Blocks are a few hundred KB even at 1080p with TR=40-64, well under the default
    # scoped-VMEM limit on all of v5e / v6e / v7x, so no vmem_limit_bytes override.
    return pl.pallas_call(
        kernel,
        out_shape=jax.ShapeDtypeStruct((B, H, W), jnp.float32),
        grid=(B, nrt),
        in_specs=[
            smem,                                                        # dmin  (B,)
            smem,                                                        # rng   (B,)
            smem,                                                        # w1    (576,)
            smem,                                                        # b1    (32,)
            smem,                                                        # w2    (288,)
            smem,                                                        # b2    (1,)
            pl.BlockSpec((1, 1, TR + 4, W), lambda b, t: (b, t, 0, 0)),  # depth slabs
            pl.BlockSpec((1, 1, TR + 4, W), lambda b, t: (b, t, 0, 0)),  # canny slabs
        ],
        out_specs=pl.BlockSpec((1, TR, W), lambda b, t: (b, t, 0)),
        compiler_params=pltpu.CompilerParams(
            dimension_semantics=("parallel", "parallel")),
    )(dmin, rng, params["w1"], params["b1"], params["w2"], params["b2"],
      d_tiles, c_tiles)


# --------------------------------- parameters ----------------------------------

def init_params(key):
    # Deterministic synthetic weights for refine = Conv2d(2,32,3,p=1)->ReLU->Conv2d(32,1,3,p=1),
    # flattened to SMEM-friendly 1-D f32 arrays.
    k1, k2, k3, k4 = jax.random.split(key, 4)
    fan1, fan2 = 2 * 3 * 3, 32 * 3 * 3
    bnd1, bnd2 = 1.0 / math.sqrt(fan1), 1.0 / math.sqrt(fan2)
    w1 = jax.random.uniform(k1, (32, 2, 3, 3), jnp.float32, -bnd1, bnd1)
    b1 = jax.random.uniform(k2, (32,), jnp.float32, -bnd1, bnd1)
    w2 = jax.random.uniform(k3, (1, 32, 3, 3), jnp.float32, -bnd2, bnd2)
    b2 = jax.random.uniform(k4, (1,), jnp.float32, -bnd2, bnd2)
    return {
        "w1": w1.reshape(-1),       # (576,) index = oc*18 + c*9 + ky*3 + kx
        "b1": b1,                   # (32,)
        "w2": w2[0].reshape(-1),    # (288,) index = ic*9 + ky*3 + kx
        "b2": b2,                   # (1,)
    }


# --------------------------------- forward -------------------------------------

def midas_depth_forward(x, params, *, row_tile=None):
    """x: (B, 4, H, W) float32 NCHW (RGB + canny). Returns refined depth (B, 1, H, W)."""
    B, _, H, W = x.shape
    rgb = x[:, :3]
    canny = x[:, 3]                                                   # (B, H, W)

    # TODO(synk): the real torch.hub 'intel-isl/MiDaS' DPT_Large backbone (pretrained
    # ViT-L) cannot be reproduced in-script; a deterministic luminance proxy stands in
    # as the depth predictor so the rest of the forward pass is exercised.
    # Luminance is linear, so computing it before the bilinear resize is exact and
    # cuts resize traffic 3x; plain jnp lets XLA fuse it into the resize input read.
    lum = 0.299 * rgb[:, 0] + 0.587 * rgb[:, 1] + 0.114 * rgb[:, 2]   # (B, H, W)
    depth384 = jax.image.resize(lum[:, None], (B, 1, MIDAS_SIZE, MIDAS_SIZE),
                                method="bilinear", antialias=False)
    depth = jax.image.resize(depth384, (B, 1, H, W),
                             method="bilinear", antialias=False)[:, 0]  # (B, H, W)

    refined = refine_rowtiled(depth, canny, params, row_tile=row_tile)  # (B, H, W)
    return refined[:, None]                                             # (B, 1, H, W)


if __name__ == "__main__":
    key = jax.random.PRNGKey(0)
    kdata, kparam = jax.random.split(key)
    B, C, H, W = 2, 4, 16, 16
    x = jax.random.uniform(kdata, (B, C, H, W), jnp.float32)
    params = init_params(kparam)

    fwd = jax.jit(midas_depth_forward)   # demo: TR=8 -> grid (2, 2), row tiling exercised
    y = fwd(x, params)
    jax.block_until_ready(y)
    assert y.shape == (B, 1, H, W) and y.dtype == jnp.float32
    print("KERNEL_OK")
</pallas_src>

<mosaic_0001>
module attributes {stable_mosaic.version = 11 : i64} {
  func.func @_refine_kernel(%arg0: i32, %arg1: i32, %arg2: memref<2xf32, #tpu.memory_space<smem>>, %arg3: memref<2xf32, #tpu.memory_space<smem>>, %arg4: memref<576xf32, #tpu.memory_space<smem>>, %arg5: memref<32xf32, #tpu.memory_space<smem>>, %arg6: memref<288xf32, #tpu.memory_space<smem>>, %arg7: memref<1xf32, #tpu.memory_space<smem>>, %arg8: memref<1x1x12x16xf32, #tpu.memory_space<vmem>>, %arg9: memref<1x1x12x16xf32, #tpu.memory_space<vmem>>, %arg10: memref<1x8x16xf32, #tpu.memory_space<vmem>>) attributes {dimension_semantics = [#tpu.dimension_semantics<parallel>, #tpu.dimension_semantics<parallel>], iteration_bounds = array<i64: 2, 2>, scalar_prefetch = 0 : i64, scratch_operands = 0 : i64, tpu.core_type = #tpu.core_type<tc>, window_params = [{transform_indices = @transform_0, window_bounds = array<i64: 2>}, {transform_indices = @transform_1, window_bounds = array<i64: 2>}, {transform_indices = @transform_2, window_bounds = array<i64: 576>}, {transform_indices = @transform_3, window_bounds = array<i64: 32>}, {transform_indices = @transform_4, window_bounds = array<i64: 288>}, {transform_indices = @transform_5, window_bounds = array<i64: 1>}, {transform_indices = @transform_6, window_bounds = array<i64: 1, 1, 12, 16>}, {transform_indices = @transform_7, window_bounds = array<i64: 1, 1, 12, 16>}, {transform_indices = @transform_8, window_bounds = array<i64: 1, 8, 16>}]} {
    %0 = arith.index_cast %arg0 : i32 to index
    %1 = memref.load %arg2[%0] : memref<2xf32, #tpu.memory_space<smem>>
    %2 = arith.index_cast %arg0 : i32 to index
    %3 = memref.load %arg3[%2] : memref<2xf32, #tpu.memory_space<smem>>
    %c0 = arith.constant 0 : index
    %c0_0 = arith.constant 0 : index
    %c0_1 = arith.constant 0 : index
    %c0_2 = arith.constant 0 : index
    %4 = vector.load %arg8[%c0, %c0_0, %c0_1, %c0_2] : memref<1x1x12x16xf32, #tpu.memory_space<vmem>>, vector<1x1x12x16xf32>
    %5 = vector.shape_cast %4 : vector<1x1x12x16xf32> to vector<12x16xf32>
    %6 = vector.broadcast %1 : f32 to vector<12x16xf32>
    %7 = arith.subf %5, %6 : vector<12x16xf32>
    %8 = vector.broadcast %3 : f32 to vector<12x16xf32>
    %9 = arith.divf %7, %8 : vector<12x16xf32>
    %cst = arith.constant 1.400000e-01 : f32
    %10 = vector.broadcast %cst : f32 to vector<12x16xf32>
    %11 = arith.addf %9, %10 : vector<12x16xf32>
    %cst_3 = arith.constant 1.000000e+00 : f32
    %12 = vector.broadcast %cst_3 : f32 to vector<12x16xf32>
    %13 = arith.divf %12, %11 : vector<12x16xf32>
    %14 = tpu.iota {dimensions = array<i32: 0>} : vector<12x1xi32>
    %c8_i32 = arith.constant 8 : i32
    %15 = arith.muli %arg1, %c8_i32 : i32
    %c2_i32 = arith.constant 2 : i32
    %16 = arith.subi %15, %c2_i32 : i32
    %17 = vector.broadcast %16 : i32 to vector<12x1xi32>
    %18 = arith.addi %14, %17 : vector<12x1xi32>
    %c0_i32 = arith.constant 0 : i32
    %19 = vector.broadcast %c0_i32 : i32 to vector<12x1xi32>
    %20 = arith.cmpi sge, %18, %19 : vector<12x1xi32>
    %c16_i32 = arith.constant 16 : i32
    %21 = vector.broadcast %c16_i32 : i32 to vector<12x1xi32>
    %22 = arith.cmpi slt, %18, %21 : vector<12x1xi32>
    %23 = arith.andi %20, %22 : vector<12x1xi1>
    %cst_4 = arith.constant 0.000000e+00 : f32
    %24 = vector.shape_cast %23 : vector<12x1xi1> to vector<12x1xi1>
    %25 = vector.broadcast %24 : vector<12x1xi1> to vector<12x16xi1>
    %26 = vector.broadcast %cst_4 : f32 to vector<12x16xf32>
    %27 = arith.select %25, %13, %26 : vector<12x16xi1>, vector<12x16xf32>
    %c0_5 = arith.constant 0 : index
    %c0_6 = arith.constant 0 : index
    %c0_7 = arith.constant 0 : index
    %c0_8 = arith.constant 0 : index
    %28 = vector.load %arg9[%c0_5, %c0_6, %c0_7, %c0_8] : memref<1x1x12x16xf32, #tpu.memory_space<vmem>>, vector<1x1x12x16xf32>
    %29 = vector.shape_cast %28 : vector<1x1x12x16xf32> to vector<12x16xf32>
    %cst_9 = arith.constant 0.000000e+00 : f32
    %30 = vector.broadcast %cst_9 : f32 to vector<12x1xf32>
    %31 = vector.extract_strided_slice %27 {offsets = [0, 0], sizes = [12, 15], strides = [1, 1]} : vector<12x16xf32> to vector<12x15xf32>
    %32 = tpu.concatenate %30, %31 in 1 : vector<12x1xf32>, vector<12x15xf32> -> vector<12x16xf32>
    %33 = vector.extract_strided_slice %27 {offsets = [0, 1], sizes = [12, 15], strides = [1, 1]} : vector<12x16xf32> to vector<12x15xf32>
    %34 = tpu.concatenate %33, %30 in 1 : vector<12x15xf32>, vector<12x1xf32> -> vector<12x16xf32>
    %cst_10 = arith.constant 0.000000e+00 : f32
    %35 = vector.broadcast %cst_10 : f32 to vector<12x1xf32>
    %36 = vector.extract_strided_slice %29 {offsets = [0, 0], sizes = [12, 15], strides = [1, 1]} : vector<12x16xf32> to vector<12x15xf32>
    %37 = tpu.concatenate %35, %36 in 1 : vector<12x1xf32>, vector<12x15xf32> -> vector<12x16xf32>
    %38 = vector.extract_strided_slice %29 {offsets = [0, 1], sizes = [12, 15], strides = [1, 1]} : vector<12x16xf32> to vector<12x15xf32>
    %39 = tpu.concatenate %38, %35 in 1 : vector<12x15xf32>, vector<12x1xf32> -> vector<12x16xf32>
    %40 = tpu.iota {dimensions = array<i32: 0>} : vector<10x1xi32>
    %c8_i32_11 = arith.constant 8 : i32
    %41 = arith.muli %arg1, %c8_i32_11 : i32
    %c1_i32 = arith.constant 1 : i32
    %42 = arith.subi %41, %c1_i32 : i32
    %43 = vector.broadcast %42 : i32 to vector<10x1xi32>
    %44 = arith.addi %40, %43 : vector<10x1xi32>
    %c0_i32_12 = arith.constant 0 : i32
    %45 = vector.broadcast %c0_i32_12 : i32 to vector<10x1xi32>
    %46 = arith.cmpi sge, %44, %45 : vector<10x1xi32>
    %c16_i32_13 = arith.constant 16 : i32
    %47 = vector.broadcast %c16_i32_13 : i32 to vector<10x1xi32>
    %48 = arith.cmpi slt, %44, %47 : vector<10x1xi32>
    %49 = arith.andi %46, %48 : vector<10x1xi1>
    %cst_14 = arith.constant 0.000000e+00 : f32
    %50 = vector.broadcast %cst_14 : f32 to vector<8x16xf32>
    %c0_i32_15 = arith.constant 0 : i32
    %c32_i32 = arith.constant 32 : i32
    %51 = arith.addi %c0_i32_15, %c32_i32 : i32
    %c1_i32_16 = arith.constant 1 : i32
    %52 = scf.for %arg11 = %c0_i32_15 to %51 step %c1_i32_16 iter_args(%arg12 = %50) -> (vector<8x16xf32>)  : i32 {
      %cst_22 = arith.constant 0.000000e+00 : f32
      %59 = vector.broadcast %cst_22 : f32 to vector<10x16xf32>
      %c18_i32 = arith.constant 18 : i32
      %60 = arith.muli %arg11, %c18_i32 : i32
      %c0_i32_23 = arith.constant 0 : i32
      %61 = arith.addi %60, %c0_i32_23 : i32
      %c0_i32_24 = arith.constant 0 : i32
      %62 = arith.addi %61, %c0_i32_24 : i32
      %c0_i32_25 = arith.constant 0 : i32
      %63 = arith.addi %62, %c0_i32_25 : i32
      %64 = arith.index_cast %63 : i32 to index
      %65 = memref.load %arg4[%64] : memref<576xf32, #tpu.memory_space<smem>>
      %66 = vector.extract_strided_slice %32 {offsets = [0, 0], sizes = [10, 16], strides = [1, 1]} : vector<12x16xf32> to vector<10x16xf32>
      %67 = vector.broadcast %65 : f32 to vector<10x16xf32>
      %68 = arith.mulf %67, %66 : vector<10x16xf32>
      %69 = arith.addf %59, %68 : vector<10x16xf32>
      %c18_i32_26 = arith.constant 18 : i32
      %70 = arith.muli %arg11, %c18_i32_26 : i32
      %c0_i32_27 = arith.constant 0 : i32
      %71 = arith.addi %70, %c0_i32_27 : i32
      %c0_i32_28 = arith.constant 0 : i32
      %72 = arith.addi %71, %c0_i32_28 : i32
      %c1_i32_29 = arith.constant 1 : i32
      %73 = arith.addi %72, %c1_i32_29 : i32
      %74 = arith.index_cast %73 : i32 to index
      %75 = memref.load %arg4[%74] : memref<576xf32, #tpu.memory_space<smem>>
      %76 = vector.extract_strided_slice %27 {offsets = [0, 0], sizes = [10, 16], strides = [1, 1]} : vector<12x16xf32> to vector<10x16xf32>
      %77 = vector.broadcast %75 : f32 to vector<10x16xf32>
      %78 = arith.mulf %77, %76 : vector<10x16xf32>
      %79 = arith.addf %69, %78 : vector<10x16xf32>
      %c18_i32_30 = arith.constant 18 : i32
      %80 = arith.muli %arg11, %c18_i32_30 : i32
      %c0_i32_31 = arith.constant 0 : i32
      %81 = arith.addi %80, %c0_i32_31 : i32
      %c0_i32_32 = arith.constant 0 : i32
      %82 = arith.addi %81, %c0_i32_32 : i32
      %c2_i32_33 = arith.constant 2 : i32
      %83 = arith.addi %82, %c2_i32_33 : i32
      %84 = arith.index_cast %83 : i32 to index
      %85 = memref.load %arg4[%84] : memref<576xf32, #tpu.memory_space<smem>>
      %86 = vector.extract_strided_slice %34 {offsets = [0, 0], sizes = [10, 16], strides = [1, 1]} : vector<12x16xf32> to vector<10x16xf32>
      %87 = vector.broadcast %85 : f32 to vector<10x16xf32>
      %88 = arith.mulf %87, %86 : vector<10x16xf32>
      %89 = arith.addf %79, %88 : vector<10x16xf32>
      %c18_i32_34 = arith.constant 18 : i32
      %90 = arith.muli %arg11, %c18_i32_34 : i32
      %c0_i32_35 = arith.constant 0 : i32
      %91 = arith.addi %90, %c0_i32_35 : i32
      %c3_i32 = arith.constant 3 : i32
      %92 = arith.addi %91, %c3_i32 : i32
      %c0_i32_36 = arith.constant 0 : i32
      %93 = arith.addi %92, %c0_i32_36 : i32
      %94 = arith.index_cast %93 : i32 to index
      %95 = memref.load %arg4[%94] : memref<576xf32, #tpu.memory_space<smem>>
      %96 = vector.extract_strided_slice %32 {offsets = [1, 0], sizes = [10, 16], strides = [1, 1]} : vector<12x16xf32> to vector<10x16xf32>
      %97 = vector.broadcast %95 : f32 to vector<10x16xf32>
      %98 = arith.mulf %97, %96 : vector<10x16xf32>
      %99 = arith.addf %89, %98 : vector<10x16xf32>
      %c18_i32_37 = arith.constant 18 : i32
      %100 = arith.muli %arg11, %c18_i32_37 : i32
      %c0_i32_38 = arith.constant 0 : i32
      %101 = arith.addi %100, %c0_i32_38 : i32
      %c3_i32_39 = arith.constant 3 : i32
      %102 = arith.addi %101, %c3_i32_39 : i32
      %c1_i32_40 = arith.constant 1 : i32
      %103 = arith.addi %102, %c1_i32_40 : i32
      %104 = arith.index_cast %103 : i32 to index
      %105 = memref.load %arg4[%104] : memref<576xf32, #tpu.memory_space<smem>>
      %106 = vector.extract_strided_slice %27 {offsets = [1, 0], sizes = [10, 16], strides = [1, 1]} : vector<12x16xf32> to vector<10x16xf32>
      %107 = vector.broadcast %105 : f32 to vector<10x16xf32>
      %108 = arith.mulf %107, %106 : vector<10x16xf32>
      %109 = arith.addf %99, %108 : vector<10x16xf32>
      %c18_i32_41 = arith.constant 18 : i32
      %110 = arith.muli %arg11, %c18_i32_41 : i32
      %c0_i32_42 = arith.constant 0 : i32
      %111 = arith.addi %110, %c0_i32_42 : i32
      %c3_i32_43 = arith.constant 3 : i32
      %112 = arith.addi %111, %c3_i32_43 : i32
      %c2_i32_44 = arith.constant 2 : i32
      %113 = arith.addi %112, %c2_i32_44 : i32
      %114 = arith.index_cast %113 : i32 to index
      %115 = memref.load %arg4[%114] : memref<576xf32, #tpu.memory_space<smem>>
      %116 = vector.extract_strided_slice %34 {offsets = [1, 0], sizes = [10, 16], strides = [1, 1]} : vector<12x16xf32> to vector<10x16xf32>
      %117 = vector.broadcast %115 : f32 to vector<10x16xf32>
      %118 = arith.mulf %117, %116 : vector<10x16xf32>
      %119 = arith.addf %109, %118 : vector<10x16xf32>
      %c18_i32_45 = arith.constant 18 : i32
      %120 = arith.muli %arg11, %c18_i32_45 : i32
      %c0_i32_46 = arith.constant 0 : i32
      %121 = arith.addi %120, %c0_i32_46 : i32
      %c6_i32 = arith.constant 6 : i32
      %122 = arith.addi %121, %c6_i32 : i32
      %c0_i32_47 = arith.constant 0 : i32
      %123 = arith.addi %122, %c0_i32_47 : i32
      %124 = arith.index_cast %123 : i32 to index
      %125 = memref.load %arg4[%124] : memref<576xf32, #tpu.memory_space<smem>>
      %126 = vector.extract_strided_slice %32 {offsets = [2, 0], sizes = [10, 16], strides = [1, 1]} : vector<12x16xf32> to vector<10x16xf32>
      %127 = vector.broadcast %125 : f32 to vector<10x16xf32>
      %128 = arith.mulf %127, %126 : vector<10x16xf32>
      %129 = arith.addf %119, %128 : vector<10x16xf32>
      %c18_i32_48 = arith.constant 18 : i32
      %130 = arith.muli %arg11, %c18_i32_48 : i32
      %c0_i32_49 = arith.constant 0 : i32
      %131 = arith.addi %130, %c0_i32_49 : i32
      %c6_i32_50 = arith.constant 6 : i32
      %132 = arith.addi %131, %c6_i32_50 : i32
      %c1_i32_51 = arith.constant 1 : i32
      %133 = arith.addi %132, %c1_i32_51 : i32
      %134 = arith.index_cast %133 : i32 to index
      %135 = memref.load %arg4[%134] : memref<576xf32, #tpu.memory_space<smem>>
      %136 = vector.extract_strided_slice %27 {offsets = [2, 0], sizes = [10, 16], strides = [1, 1]} : vector<12x16xf32> to vector<10x16xf32>
      %137 = vector.broadcast %135 : f32 to vector<10x16xf32>
      %138 = arith.mulf %137, %136 : vector<10x16xf32>
      %139 = arith.addf %129, %138 : vector<10x16xf32>
      %c18_i32_52 = arith.constant 18 : i32
      %140 = arith.muli %arg11, %c18_i32_52 : i32
      %c0_i32_53 = arith.constant 0 : i32
      %141 = arith.addi %140, %c0_i32_53 : i32
      %c6_i32_54 = arith.constant 6 : i32
      %142 = arith.addi %141, %c6_i32_54 : i32
      %c2_i32_55 = arith.constant 2 : i32
      %143 = arith.addi %142, %c2_i32_55 : i32
      %144 = arith.index_cast %143 : i32 to index
      %145 = memref.load %arg4[%144] : memref<576xf32, #tpu.memory_space<smem>>
      %146 = vector.extract_strided_slice %34 {offsets = [2, 0], sizes = [10, 16], strides = [1, 1]} : vector<12x16xf32> to vector<10x16xf32>
      %147 = vector.broadcast %145 : f32 to vector<10x16xf32>
      %148 = arith.mulf %147, %146 : vector<10x16xf32>
      %149 = arith.addf %139, %148 : vector<10x16xf32>
      %c18_i32_56 = arith.constant 18 : i32
      %150 = arith.muli %arg11, %c18_i32_56 : i32
      %c9_i32 = arith.constant 9 : i32
      %151 = arith.addi %150, %c9_i32 : i32
      %c0_i32_57 = arith.constant 0 : i32
      %152 = arith.addi %151, %c0_i32_57 : i32
      %c0_i32_58 = arith.constant 0 : i32
      %153 = arith.addi %152, %c0_i32_58 : i32
      %154 = arith.index_cast %153 : i32 to index
      %155 = memref.load %arg4[%154] : memref<576xf32, #tpu.memory_space<smem>>
      %156 = vector.extract_strided_slice %37 {offsets = [0, 0], sizes = [10, 16], strides = [1, 1]} : vector<12x16xf32> to vector<10x16xf32>
      %157 = vector.broadcast %155 : f32 to vector<10x16xf32>
      %158 = arith.mulf %157, %156 : vector<10x16xf32>
      %159 = arith.addf %149, %158 : vector<10x16xf32>
      %c18_i32_59 = arith.constant 18 : i32
      %160 = arith.muli %arg11, %c18_i32_59 : i32
      %c9_i32_60 = arith.constant 9 : i32
      %161 = arith.addi %160, %c9_i32_60 : i32
      %c0_i32_61 = arith.constant 0 : i32
      %162 = arith.addi %161, %c0_i32_61 : i32
      %c1_i32_62 = arith.constant 1 : i32
      %163 = arith.addi %162, %c1_i32_62 : i32
      %164 = arith.index_cast %163 : i32 to index
      %165 = memref.load %arg4[%164] : memref<576xf32, #tpu.memory_space<smem>>
      %166 = vector.extract_strided_slice %29 {offsets = [0, 0], sizes = [10, 16], strides = [1, 1]} : vector<12x16xf32> to vector<10x16xf32>
      %167 = vector.broadcast %165 : f32 to vector<10x16xf32>
      %168 = arith.mulf %167, %166 : vector<10x16xf32>
      %169 = arith.addf %159, %168 : vector<10x16xf32>
      %c18_i32_63 = arith.constant 18 : i32
      %170 = arith.muli %arg11, %c18_i32_63 : i32
      %c9_i32_64 = arith.constant 9 : i32
      %171 = arith.addi %170, %c9_i32_64 : i32
      %c0_i32_65 = arith.constant 0 : i32
      %172 = arith.addi %171, %c0_i32_65 : i32
      %c2_i32_66 = arith.constant 2 : i32
      %173 = arith.addi %172, %c2_i32_66 : i32
      %174 = arith.index_cast %173 : i32 to index
      %175 = memref.load %arg4[%174] : memref<576xf32, #tpu.memory_space<smem>>
      %176 = vector.extract_strided_slice %39 {offsets = [0, 0], sizes = [10, 16], strides = [1, 1]} : vector<12x16xf32> to vector<10x16xf32>
      %177 = vector.broadcast %175 : f32 to vector<10x16xf32>
      %178 = arith.mulf %177, %176 : vector<10x16xf32>
      %179 = arith.addf %169, %178 : vector<10x16xf32>
      %c18_i32_67 = arith.constant 18 : i32
      %180 = arith.muli %arg11, %c18_i32_67 : i32
      %c9_i32_68 = arith.constant 9 : i32
      %181 = arith.addi %180, %c9_i32_68 : i32
      %c3_i32_69 = arith.constant 3 : i32
      %182 = arith.addi %181, %c3_i32_69 : i32
      %c0_i32_70 = arith.constant 0 : i32
      %183 = arith.addi %182, %c0_i32_70 : i32
      %184 = arith.index_cast %183 : i32 to index
      %185 = memref.load %arg4[%184] : memref<576xf32, #tpu.memory_space<smem>>
      %186 = vector.extract_strided_slice %37 {offsets = [1, 0], sizes = [10, 16], strides = [1, 1]} : vector<12x16xf32> to vector<10x16xf32>
      %187 = vector.broadcast %185 : f32 to vector<10x16xf32>
      %188 = arith.mulf %187, %186 : vector<10x16xf32>
      %189 = arith.addf %179, %188 : vector<10x16xf32>
      %c18_i32_71 = arith.constant 18 : i32
      %190 = arith.muli %arg11, %c18_i32_71 : i32
      %c9_i32_72 = arith.constant 9 : i32
      %191 = arith.addi %190, %c9_i32_72 : i32
      %c3_i32_73 = arith.constant 3 : i32
      %192 = arith.addi %191, %c3_i32_73 : i32
      %c1_i32_74 = arith.constant 1 : i32
      %193 = arith.addi %192, %c1_i32_74 : i32
      %194 = arith.index_cast %193 : i32 to index
      %195 = memref.load %arg4[%194] : memref<576xf32, #tpu.memory_space<smem>>
      %196 = vector.extract_strided_slice %29 {offsets = [1, 0], sizes = [10, 16], strides = [1, 1]} : vector<12x16xf32> to vector<10x16xf32>
      %197 = vector.broadcast %195 : f32 to vector<10x16xf32>
      %198 = arith.mulf %197, %196 : vector<10x16xf32>
      %199 = arith.addf %189, %198 : vector<10x16xf32>
      %c18_i32_75 = arith.constant 18 : i32
      %200 = arith.muli %arg11, %c18_i32_75 : i32
      %c9_i32_76 = arith.constant 9 : i32
      %201 = arith.addi %200, %c9_i32_76 : i32
      %c3_i32_77 = arith.constant 3 : i32
      %202 = arith.addi %201, %c3_i32_77 : i32
      %c2_i32_78 = arith.constant 2 : i32
      %203 = arith.addi %202, %c2_i32_78 : i32
      %204 = arith.index_cast %203 : i32 to index
      %205 = memref.load %arg4[%204] : memref<576xf32, #tpu.memory_space<smem>>
      %206 = vector.extract_strided_slice %39 {offsets = [1, 0], sizes = [10, 16], strides = [1, 1]} : vector<12x16xf32> to vector<10x16xf32>
      %207 = vector.broadcast %205 : f32 to vector<10x16xf32>
      %208 = arith.mulf %207, %206 : vector<10x16xf32>
      %209 = arith.addf %199, %208 : vector<10x16xf32>
      %c18_i32_79 = arith.constant 18 : i32
      %210 = arith.muli %arg11, %c18_i32_79 : i32
      %c9_i32_80 = arith.constant 9 : i32
      %211 = arith.addi %210, %c9_i32_80 : i32
      %c6_i32_81 = arith.constant 6 : i32
      %212 = arith.addi %211, %c6_i32_81 : i32
      %c0_i32_82 = arith.constant 0 : i32
      %213 = arith.addi %212, %c0_i32_82 : i32
      %214 = arith.index_cast %213 : i32 to index
      %215 = memref.load %arg4[%214] : memref<576xf32, #tpu.memory_space<smem>>
      %216 = vector.extract_strided_slice %37 {offsets = [2, 0], sizes = [10, 16], strides = [1, 1]} : vector<12x16xf32> to vector<10x16xf32>
      %217 = vector.broadcast %215 : f32 to vector<10x16xf32>
      %218 = arith.mulf %217, %216 : vector<10x16xf32>
      %219 = arith.addf %209, %218 : vector<10x16xf32>
      %c18_i32_83 = arith.constant 18 : i32
      %220 = arith.muli %arg11, %c18_i32_83 : i32
      %c9_i32_84 = arith.constant 9 : i32
      %221 = arith.addi %220, %c9_i32_84 : i32
      %c6_i32_85 = arith.constant 6 : i32
      %222 = arith.addi %221, %c6_i32_85 : i32
      %c1_i32_86 = arith.constant 1 : i32
      %223 = arith.addi %222, %c1_i32_86 : i32
      %224 = arith.index_cast %223 : i32 to index
      %225 = memref.load %arg4[%224] : memref<576xf32, #tpu.memory_space<smem>>
      %226 = vector.extract_strided_slice %29 {offsets = [2, 0], sizes = [10, 16], strides = [1, 1]} : vector<12x16xf32> to vector<10x16xf32>
      %227 = vector.broadcast %225 : f32 to vector<10x16xf32>
      %228 = arith.mulf %227, %226 : vector<10x16xf32>
      %229 = arith.addf %219, %228 : vector<10x16xf32>
      %c18_i32_87 = arith.constant 18 : i32
      %230 = arith.muli %arg11, %c18_i32_87 : i32
      %c9_i32_88 = arith.constant 9 : i32
      %231 = arith.addi %230, %c9_i32_88 : i32
      %c6_i32_89 = arith.constant 6 : i32
      %232 = arith.addi %231, %c6_i32_89 : i32
      %c2_i32_90 = arith.constant 2 : i32
      %233 = arith.addi %232, %c2_i32_90 : i32
      %234 = arith.index_cast %233 : i32 to index
      %235 = memref.load %arg4[%234] : memref<576xf32, #tpu.memory_space<smem>>
      %236 = vector.extract_strided_slice %39 {offsets = [2, 0], sizes = [10, 16], strides = [1, 1]} : vector<12x16xf32> to vector<10x16xf32>
      %237 = vector.broadcast %235 : f32 to vector<10x16xf32>
      %238 = arith.mulf %237, %236 : vector<10x16xf32>
      %239 = arith.addf %229, %238 : vector<10x16xf32>
      %240 = arith.index_cast %arg11 : i32 to index
      %241 = memref.load %arg5[%240] : memref<32xf32, #tpu.memory_space<smem>>
      %242 = vector.broadcast %241 : f32 to vector<10x16xf32>
      %243 = arith.addf %239, %242 : vector<10x16xf32>
      %cst_91 = arith.constant 0.000000e+00 : f32
      %244 = vector.broadcast %cst_91 : f32 to vector<10x16xf32>
      %245 = arith.maximumf %243, %244 : vector<10x16xf32>
      %cst_92 = arith.constant 0.000000e+00 : f32
      %246 = vector.shape_cast %49 : vector<10x1xi1> to vector<10x1xi1>
      %247 = vector.broadcast %246 : vector<10x1xi1> to vector<10x16xi1>
      %248 = vector.broadcast %cst_92 : f32 to vector<10x16xf32>
      %249 = arith.select %247, %245, %248 : vector<10x16xi1>, vector<10x16xf32>
      %cst_93 = arith.constant 0.000000e+00 : f32
      %250 = vector.broadcast %cst_93 : f32 to vector<10x1xf32>
      %251 = vector.extract_strided_slice %249 {offsets = [0, 0], sizes = [10, 15], strides = [1, 1]} : vector<10x16xf32> to vector<10x15xf32>
      %252 = tpu.concatenate %250, %251 in 1 : vector<10x1xf32>, vector<10x15xf32> -> vector<10x16xf32>
      %253 = vector.extract_strided_slice %249 {offsets = [0, 1], sizes = [10, 15], strides = [1, 1]} : vector<10x16xf32> to vector<10x15xf32>
      %254 = tpu.concatenate %253, %250 in 1 : vector<10x15xf32>, vector<10x1xf32> -> vector<10x16xf32>
      %c9_i32_94 = arith.constant 9 : i32
      %255 = arith.muli %arg11, %c9_i32_94 : i32
      %c0_i32_95 = arith.constant 0 : i32
      %256 = arith.addi %255, %c0_i32_95 : i32
      %c0_i32_96 = arith.constant 0 : i32
      %257 = arith.addi %256, %c0_i32_96 : i32
      %258 = arith.index_cast %257 : i32 to index
      %259 = memref.load %arg6[%258] : memref<288xf32, #tpu.memory_space<smem>>
      %260 = vector.extract_strided_slice %252 {offsets = [0, 0], sizes = [8, 16], strides = [1, 1]} : vector<10x16xf32> to vector<8x16xf32>
      %261 = vector.broadcast %259 : f32 to vector<8x16xf32>
      %262 = arith.mulf %261, %260 : vector<8x16xf32>
      %263 = arith.addf %arg12, %262 : vector<8x16xf32>
      %c9_i32_97 = arith.constant 9 : i32
      %264 = arith.muli %arg11, %c9_i32_97 : i32
      %c0_i32_98 = arith.constant 0 : i32
      %265 = arith.addi %264, %c0_i32_98 : i32
      %c1_i32_99 = arith.constant 1 : i32
      %266 = arith.addi %265, %c1_i32_99 : i32
      %267 = arith.index_cast %266 : i32 to index
      %268 = memref.load %arg6[%267] : memref<288xf32, #tpu.memory_space<smem>>
      %269 = vector.extract_strided_slice %249 {offsets = [0, 0], sizes = [8, 16], strides = [1, 1]} : vector<10x16xf32> to vector<8x16xf32>
      %270 = vector.broadcast %268 : f32 to vector<8x16xf32>
      %271 = arith.mulf %270, %269 : vector<8x16xf32>
      %272 = arith.addf %263, %271 : vector<8x16xf32>
      %c9_i32_100 = arith.constant 9 : i32
      %273 = arith.muli %arg11, %c9_i32_100 : i32
      %c0_i32_101 = arith.constant 0 : i32
      %274 = arith.addi %273, %c0_i32_101 : i32
      %c2_i32_102 = arith.constant 2 : i32
      %275 = arith.addi %274, %c2_i32_102 : i32
      %276 = arith.index_cast %275 : i32 to index
      %277 = memref.load %arg6[%276] : memref<288xf32, #tpu.memory_space<smem>>
      %278 = vector.extract_strided_slice %254 {offsets = [0, 0], sizes = [8, 16], strides = [1, 1]} : vector<10x16xf32> to vector<8x16xf32>
      %279 = vector.broadcast %277 : f32 to vector<8x16xf32>
      %280 = arith.mulf %279, %278 : vector<8x16xf32>
      %281 = arith.addf %272, %280 : vector<8x16xf32>
      %c9_i32_103 = arith.constant 9 : i32
      %282 = arith.muli %arg11, %c9_i32_103 : i32
      %c3_i32_104 = arith.constant 3 : i32
      %283 = arith.addi %282, %c3_i32_104 : i32
      %c0_i32_105 = arith.constant 0 : i32
      %284 = arith.addi %283, %c0_i32_105 : i32
      %285 = arith.index_cast %284 : i32 to index
      %286 = memref.load %arg6[%285] : memref<288xf32, #tpu.memory_space<smem>>
      %287 = vector.extract_strided_slice %252 {offsets = [1, 0], sizes = [8, 16], strides = [1, 1]} : vector<10x16xf32> to vector<8x16xf32>
      %288 = vector.broadcast %286 : f32 to vector<8x16xf32>
      %289 = arith.mulf %288, %287 : vector<8x16xf32>
      %290 = arith.addf %281, %289 : vector<8x16xf32>
      %c9_i32_106 = arith.constant 9 : i32
      %291 = arith.muli %arg11, %c9_i32_106 : i32
      %c3_i32_107 = arith.constant 3 : i32
      %292 = arith.addi %291, %c3_i32_107 : i32
      %c1_i32_108 = arith.constant 1 : i32
      %293 = arith.addi %292, %c1_i32_108 : i32
      %294 = arith.index_cast %293 : i32 to index
      %295 = memref.load %arg6[%294] : memref<288xf32, #tpu.memory_space<smem>>
      %296 = vector.extract_strided_slice %249 {offsets = [1, 0], sizes = [8, 16], strides = [1, 1]} : vector<10x16xf32> to vector<8x16xf32>
      %297 = vector.broadcast %295 : f32 to vector<8x16xf32>
      %298 = arith.mulf %297, %296 : vector<8x16xf32>
      %299 = arith.addf %290, %298 : vector<8x16xf32>
      %c9_i32_109 = arith.constant 9 : i32
      %300 = arith.muli %arg11, %c9_i32_109 : i32
      %c3_i32_110 = arith.constant 3 : i32
      %301 = arith.addi %300, %c3_i32_110 : i32
      %c2_i32_111 = arith.constant 2 : i32
      %302 = arith.addi %301, %c2_i32_111 : i32
      %303 = arith.index_cast %302 : i32 to index
      %304 = memref.load %arg6[%303] : memref<288xf32, #tpu.memory_space<smem>>
      %305 = vector.extract_strided_slice %254 {offsets = [1, 0], sizes = [8, 16], strides = [1, 1]} : vector<10x16xf32> to vector<8x16xf32>
      %306 = vector.broadcast %304 : f32 to vector<8x16xf32>
      %307 = arith.mulf %306, %305 : vector<8x16xf32>
      %308 = arith.addf %299, %307 : vector<8x16xf32>
      %c9_i32_112 = arith.constant 9 : i32
      %309 = arith.muli %arg11, %c9_i32_112 : i32
      %c6_i32_113 = arith.constant 6 : i32
      %310 = arith.addi %309, %c6_i32_113 : i32
      %c0_i32_114 = arith.constant 0 : i32
      %311 = arith.addi %310, %c0_i32_114 : i32
      %312 = arith.index_cast %311 : i32 to index
      %313 = memref.load %arg6[%312] : memref<288xf32, #tpu.memory_space<smem>>
      %314 = vector.extract_strided_slice %252 {offsets = [2, 0], sizes = [8, 16], strides = [1, 1]} : vector<10x16xf32> to vector<8x16xf32>
      %315 = vector.broadcast %313 : f32 to vector<8x16xf32>
      %316 = arith.mulf %315, %314 : vector<8x16xf32>
      %317 = arith.addf %308, %316 : vector<8x16xf32>
      %c9_i32_115 = arith.constant 9 : i32
      %318 = arith.muli %arg11, %c9_i32_115 : i32
      %c6_i32_116 = arith.constant 6 : i32
      %319 = arith.addi %318, %c6_i32_116 : i32
      %c1_i32_117 = arith.constant 1 : i32
      %320 = arith.addi %319, %c1_i32_117 : i32
      %321 = arith.index_cast %320 : i32 to index
      %322 = memref.load %arg6[%321] : memref<288xf32, #tpu.memory_space<smem>>
      %323 = vector.extract_strided_slice %249 {offsets = [2, 0], sizes = [8, 16], strides = [1, 1]} : vector<10x16xf32> to vector<8x16xf32>
      %324 = vector.broadcast %322 : f32 to vector<8x16xf32>
      %325 = arith.mulf %324, %323 : vector<8x16xf32>
      %326 = arith.addf %317, %325 : vector<8x16xf32>
      %c9_i32_118 = arith.constant 9 : i32
      %327 = arith.muli %arg11, %c9_i32_118 : i32
      %c6_i32_119 = arith.constant 6 : i32
      %328 = arith.addi %327, %c6_i32_119 : i32
      %c2_i32_120 = arith.constant 2 : i32
      %329 = arith.addi %328, %c2_i32_120 : i32
      %330 = arith.index_cast %329 : i32 to index
      %331 = memref.load %arg6[%330] : memref<288xf32, #tpu.memory_space<smem>>
      %332 = vector.extract_strided_slice %254 {offsets = [2, 0], sizes = [8, 16], strides = [1, 1]} : vector<10x16xf32> to vector<8x16xf32>
      %333 = vector.broadcast %331 : f32 to vector<8x16xf32>
      %334 = arith.mulf %333, %332 : vector<8x16xf32>
      %335 = arith.addf %326, %334 : vector<8x16xf32>
      scf.yield %335 : vector<8x16xf32>
    }
    %c32_i32_17 = arith.constant 32 : i32
    %c0_18 = arith.constant 0 : index
    %53 = memref.load %arg7[%c0_18] : memref<1xf32, #tpu.memory_space<smem>>
    %54 = vector.broadcast %53 : f32 to vector<8x16xf32>
    %55 = arith.addf %52, %54 : vector<8x16xf32>
    %c0_19 = arith.constant 0 : index
    %c0_20 = arith.constant 0 : index
    %c0_21 = arith.constant 0 : index
    %56 = vector.load %arg10[%c0_19, %c0_20, %c0_21] : memref<1x8x16xf32, #tpu.memory_space<vmem>>, vector<1x8x16xf32>
    %57 = vector.shape_cast %56 : vector<1x8x16xf32> to vector<8x16xf32>
    %58 = vector.shape_cast %55 : vector<8x16xf32> to vector<1x8x16xf32>
    tpu.vector_store %arg10[%c0_19, %c0_20, %c0_21], %58 {strides = array<i32>} : memref<1x8x16xf32, #tpu.memory_space<vmem>>, vector<1x8x16xf32>,
    return
  }
  func.func @transform_0(%arg0: i32, %arg1: i32) -> i32 {
    %c0_i32 = arith.constant 0 : i32
    %c0_i32_0 = arith.constant 0 : i32
    return %c0_i32 : i32
  }
  func.func @transform_1(%arg0: i32, %arg1: i32) -> i32 {
    %c0_i32 = arith.constant 0 : i32
    %c0_i32_0 = arith.constant 0 : i32
    return %c0_i32 : i32
  }
  func.func @transform_2(%arg0: i32, %arg1: i32) -> i32 {
    %c0_i32 = arith.constant 0 : i32
    %c0_i32_0 = arith.constant 0 : i32
    return %c0_i32 : i32
  }
  func.func @transform_3(%arg0: i32, %arg1: i32) -> i32 {
    %c0_i32 = arith.constant 0 : i32
    %c0_i32_0 = arith.constant 0 : i32
    return %c0_i32 : i32
  }
  func.func @transform_4(%arg0: i32, %arg1: i32) -> i32 {
    %c0_i32 = arith.constant 0 : i32
    %c0_i32_0 = arith.constant 0 : i32
    return %c0_i32 : i32
  }
  func.func @transform_5(%arg0: i32, %arg1: i32) -> i32 {
    %c0_i32 = arith.constant 0 : i32
    %c0_i32_0 = arith.constant 0 : i32
    return %c0_i32 : i32
  }
  func.func @transform_6(%arg0: i32, %arg1: i32) -> (i32, i32, i32, i32) {
    %c0_i32 = arith.constant 0 : i32
    %c0_i32_0 = arith.constant 0 : i32
    %c0_i32_1 = arith.constant 0 : i32
    return %arg0, %arg1, %c0_i32, %c0_i32_0 : i32, i32, i32, i32
  }
  func.func @transform_7(%arg0: i32, %arg1: i32) -> (i32, i32, i32, i32) {
    %c0_i32 = arith.constant 0 : i32
    %c0_i32_0 = arith.constant 0 : i32
    %c0_i32_1 = arith.constant 0 : i32
    return %arg0, %arg1, %c0_i32, %c0_i32_0 : i32, i32, i32, i32
  }
  func.func @transform_8(%arg0: i32, %arg1: i32) -> (i32, i32, i32) {
    %c0_i32 = arith.constant 0 : i32
    %c0_i32_0 = arith.constant 0 : i32
    return %arg0, %arg1, %c0_i32 : i32, i32, i32
  }
}

</mosaic_0001>

<llo_original>
// kernel: midas_depth_forward.1
$region0: #{midas_depth_forward.1}
  #allocation0 [shape = 'u32[]', space=smem, size = 0x4, offset = 0x4, fixed_abs, tag = 'smem constant byte address 0x4 - core index']
  #allocation1 [shape = 'u32[144,128]{1,0:T(1,128)}', space=vmem, size = 0x12000, scoped, tag = 'internal scratch']
  #allocation2 [shape = 'f32[1]{0:T(128)S(6)}', space=smem, size = 0x200, scoped, tag = 'scoped memory for midas_depth_forward.1']
  %s0 = inlined_call_operand.vmem [shape: f32[2], index: 0, kind: input, shape index: {}]
  %s1 = inlined_call_operand.vmem [shape: f32[2], index: 1, kind: input, shape index: {}]
  %s2 = inlined_call_operand.vmem [shape: f32[576], index: 2, kind: input, shape index: {}]
  %s3 = inlined_call_operand.vmem [shape: f32[32], index: 3, kind: input, shape index: {}]
  %s4 = inlined_call_operand.vmem [shape: f32[288], index: 4, kind: input, shape index: {}]
  %s5 = inlined_call_operand.<no memory space> [shape: f32[1], index: 5, kind: input, shape index: {}]
  %s6 = inlined_call_operand.vmem [shape: f32[2,2,12,16], index: 6, kind: input, shape index: {}]
  %s7 = inlined_call_operand.vmem [shape: f32[2,2,12,16], index: 7, kind: input, shape index: {}]
  %s8 = inlined_call_operand.hbm [shape: f32[2,16,16], index: 8, kind: output, shape index: {}]
  %s9 = sld [smem:[#allocation0]]
  $region92: #{midas_depth_forward.1} parent=0
    _
  %s11 = ssub.s32 1, %s9
  %s12 = scalar_select 0, %s11, %s9
  %13 = sst [smem:[#allocation2]] %s5
  $region1: #{midas_depth_forward.1} parent=0
    #allocation3 [shape = 'u8[512]{0}', space=smem, size = 0x200, scoped, tag = 'input window, operand 0, single buffered']
    #allocation4 [shape = 's32[2]{0}', space=sflag, size = 0x8, scoped, tag = 'scoped memory for midas_depth_forward.1']
    #allocation5 [shape = 's32[2]{0}', space=sflag, size = 0x8, scoped, tag = 'scoped memory for midas_depth_forward.1']
    #allocation6 [shape = 'u8[512]{0}', space=smem, size = 0x200, scoped, tag = 'input window, operand 1, single buffered']
    #allocation7 [shape = 's32[1]{0}', space=sflag, size = 0x4, scoped, tag = 'scoped memory for midas_depth_forward.1']
    #allocation8 [shape = 'u8[2560]{0}', space=smem, size = 0xa00, scoped, tag = 'input window, operand 2, single buffered']
    #allocation9 [shape = 'u8[512]{0}', space=smem, size = 0x200, scoped, tag = 'input window, operand 3, single buffered']
    #allocation10 [shape = 's32[1]{0}', space=sflag, size = 0x4, scoped, tag = 'scoped memory for midas_depth_forward.1']
    #allocation11 [shape = 'u8[1536]{0}', space=smem, size = 0x600, scoped, tag = 'input window, operand 4, single buffered']
    #allocation12 [shape = 'u8[8192]{0}', space=vmem, size = 0x2000, scoped, tag = 'output window, operand 0']
    %14 = vsyncpa [#allocation5], 0
    %15 = vsyncpa [#allocation7], 0
    %16 = vsyncpa [#allocation10], 0
    %17 = vsyncpa [#allocation4], 0
    %s18 = scalar_lea.sflag [#allocation4], 1
    %19 = vsyncpa %s18, 0
    loop: start=0, step=1, limit=6
    $region2: #{midas_depth_forward.1} parent=1 // loop_pre_header
      _
    $region3: #{midas_depth_forward.1} parent=1 // loop_header
      %s21 = sphi 0, %s25
      %p22 = scmp.ge.s32.totalorder %s21, 6
      %s28 = sphi 0, %s40
      %s29 = sphi 0, %s36
      %s30 = sphi 0, %s28
      %s31 = sphi 0, %s29
      %s32 = sphi 0, %s30
      %s33 = sphi 0, %s31
      %s41 = sphi 0, %s41
      %s43 = sphi 0, %s41
      %s44 = sphi 0, %s43
      %s58 = sphi 0, %s44
      %s62 = sphi 0, %s62
      %s64 = sphi 0, %s62
      %s65 = sphi 0, %s64
      %s79 = sphi 0, %s65
      %s83 = sphi 0, %s83
      %s85 = sphi 0, %s83
      %s86 = sphi 0, %s85
      %s100 = sphi 0, %s86
      %s104 = sphi 0, %s104
      %s106 = sphi 0, %s104
      %s107 = sphi 0, %s106
      %s121 = sphi 0, %s107
      %s125 = sphi 0, %s125
      %s127 = sphi 0, %s125
      %s128 = sphi 0, %s127
      %s142 = sphi 0, %s128
      %s146 = sphi 0, %s146
      %s148 = sphi 0, %s146
      %s149 = sphi 0, %s148
      %s163 = sphi 0, %s149
      %s171 = sphi 0, %s173
      %s174 = sphi 0, %s171
      %s175 = sphi 0, %s174
      %s191 = sphi 0, %s175
      %s199 = sphi 0, %s201
      %s202 = sphi 0, %s199
      %s203 = sphi 0, %s202
      %s219 = sphi 0, %s203
      %s227 = sphi 0, %s229
      %s230 = sphi 0, %s227
      %s231 = sphi 0, %s230
      %s247 = sphi 0, %s231
    $region4: #{midas_depth_forward.1} parent=1 // loop_header_branch
      %24 = sbr.rel (%p22) target = $region8
    $region5: #{midas_depth_forward.1} parent=1 // loop_body
      %s26 = ssub.s32 %s21, 1
      %s27 = ssub.s32 %s21, 2
      %s34 = sadd.s32 1, %s29
      %p35 = scmp.ge.s32.totalorder %s34, 2
      %s36 = scalar_select %p35, 0, %s34
      %s37 = sadd.s32 1, %s28
      %s38 = scalar_select %p35, %s37, %s28
      %p39 = scmp.ge.s32.totalorder %s38, 2
      %s40 = scalar_select %p39, 0, %s38
      %s42 = sadd.s32 %s41, 1
      %p45 = scmp.eq.s32.totalorder %s21, 3
      %p46 = scmp.ne.s32.totalorder %s41, %s43
      %p47 = scmp.eq.s32.totalorder %s21, 0
      %p48 = por %p46, %p47
      %p49 = scmp.ne.s32.totalorder %s41, %s43
      %p50 = scmp.eq.s32.totalorder %s26, 3
      %p51 = por %p49, %p50
      %p52 = scmp.ne.s32.totalorder %s43, %s44
      %p53 = scmp.eq.s32.totalorder %s26, 0
      %p54 = por %p52, %p53
      %p55 = scmp.ne.s32.totalorder %s43, %s44
      %p56 = scmp.eq.s32.totalorder %s27, 3
      %p57 = por %p55, %p56
      %p59 = scmp.ne.s32.totalorder %s44, %s58
      %p60 = scmp.eq.s32.totalorder %s27, 0
      %p61 = por %p59, %p60
      %s63 = sadd.s32 %s62, 1
      %p66 = scmp.eq.s32.totalorder %s21, 3
      %p67 = scmp.ne.s32.totalorder %s62, %s64
      %p68 = scmp.eq.s32.totalorder %s21, 0
      %p69 = por %p67, %p68
      %p70 = scmp.ne.s32.totalorder %s62, %s64
      %p71 = scmp.eq.s32.totalorder %s26, 3
      %p72 = por %p70, %p71
      %p73 = scmp.ne.s32.totalorder %s64, %s65
      %p74 = scmp.eq.s32.totalorder %s26, 0
      %p75 = por %p73, %p74
      %p76 = scmp.ne.s32.totalorder %s64, %s65
      %p77 = scmp.eq.s32.totalorder %s27, 3
      %p78 = por %p76, %p77
      %p80 = scmp.ne.s32.totalorder %s65, %s79
      %p81 = scmp.eq.s32.totalorder %s27, 0
      %p82 = por %p80, %p81
      %s84 = sadd.s32 %s83, 1
      %p87 = scmp.eq.s32.totalorder %s21, 3
      %p88 = scmp.ne.s32.totalorder %s83, %s85
      %p89 = scmp.eq.s32.totalorder %s21, 0
      %p90 = por %p88, %p89
      %p91 = scmp.ne.s32.totalorder %s83, %s85
      %p92 = scmp.eq.s32.totalorder %s26, 3
      %p93 = por %p91, %p92
      %p94 = scmp.ne.s32.totalorder %s85, %s86
      %p95 = scmp.eq.s32.totalorder %s26, 0
      %p96 = por %p94, %p95
      %p97 = scmp.ne.s32.totalorder %s85, %s86
      %p98 = scmp.eq.s32.totalorder %s27, 3
      %p99 = por %p97, %p98
      %p101 = scmp.ne.s32.totalorder %s86, %s100
      %p102 = scmp.eq.s32.totalorder %s27, 0
      %p103 = por %p101, %p102
      %s105 = sadd.s32 %s104, 1
      %p108 = scmp.eq.s32.totalorder %s21, 3
      %p109 = scmp.ne.s32.totalorder %s104, %s106
      %p110 = scmp.eq.s32.totalorder %s21, 0
      %p111 = por %p109, %p110
      %p112 = scmp.ne.s32.totalorder %s104, %s106
      %p113 = scmp.eq.s32.totalorder %s26, 3
      %p114 = por %p112, %p113
      %p115 = scmp.ne.s32.totalorder %s106, %s107
      %p116 = scmp.eq.s32.totalorder %s26, 0
      %p117 = por %p115, %p116
      %p118 = scmp.ne.s32.totalorder %s106, %s107
      %p119 = scmp.eq.s32.totalorder %s27, 3
      %p120 = por %p118, %p119
      %p122 = scmp.ne.s32.totalorder %s107, %s121
      %p123 = scmp.eq.s32.totalorder %s27, 0
      %p124 = por %p122, %p123
      %s126 = sadd.s32 %s125, 1
      %p129 = scmp.eq.s32.totalorder %s21, 3
      %p130 = scmp.ne.s32.totalorder %s125, %s127
      %p131 = scmp.eq.s32.totalorder %s21, 0
      %p132 = por %p130, %p131
      %p133 = scmp.ne.s32.totalorder %s125, %s127
      %p134 = scmp.eq.s32.totalorder %s26, 3
      %p135 = por %p133, %p134
      %p136 = scmp.ne.s32.totalorder %s127, %s128
      %p137 = scmp.eq.s32.totalorder %s26, 0
      %p138 = por %p136, %p137
      %p139 = scmp.ne.s32.totalorder %s127, %s128
      %p140 = scmp.eq.s32.totalorder %s27, 3
      %p141 = por %p139, %p140
      %p143 = scmp.ne.s32.totalorder %s128, %s142
      %p144 = scmp.eq.s32.totalorder %s27, 0
      %p145 = por %p143, %p144
      %s147 = sadd.s32 %s146, 1
      %p150 = scmp.eq.s32.totalorder %s21, 3
      %p151 = scmp.ne.s32.totalorder %s146, %s148
      %p152 = scmp.eq.s32.totalorder %s21, 0
      %p153 = por %p151, %p152
      %p154 = scmp.ne.s32.totalorder %s146, %s148
      %p155 = scmp.eq.s32.totalorder %s26, 3
      %p156 = por %p154, %p155
      %p157 = scmp.ne.s32.totalorder %s148, %s149
      %p158 = scmp.eq.s32.totalorder %s26, 0
      %p159 = por %p157, %p158
      %p160 = scmp.ne.s32.totalorder %s148, %s149
      %p161 = scmp.eq.s32.totalorder %s27, 3
      %p162 = por %p160, %p161
      %p164 = scmp.ne.s32.totalorder %s149, %s163
      %p165 = scmp.eq.s32.totalorder %s27, 0
      %p166 = por %p164, %p165
      %s167 = ssub.s32 %s28, %s40
      %s168 = ssub.s32 %s29, %s36
      %s169 = sor.u32 %s167, %s168
      %p170 = scmp.eq.s32.totalorder %s169, 0
      %s172 = sadd.s32 %s171, 1
      %s173 = scalar_select %p170, %s171, %s172
      %p176 = pneg %p170
      %p177 = scmp.eq.s32.totalorder %s21, 3
      %p178 = por %p176, %p177
      %p179 = scmp.ne.s32.totalorder %s171, %s174
      %p180 = scmp.eq.s32.totalorder %s21, 0
      %p181 = por %p179, %p180
      %p182 = scmp.ne.s32.totalorder %s171, %s174
      %p183 = scmp.eq.s32.totalorder %s26, 3
      %p184 = por %p182, %p183
      %p185 = scmp.ne.s32.totalorder %s174, %s175
      %p186 = scmp.eq.s32.totalorder %s26, 0
      %p187 = por %p185, %p186
      %p188 = scmp.ne.s32.totalorder %s174, %s175
      %p189 = scmp.eq.s32.totalorder %s27, 3
      %p190 = por %p188, %p189
      %p192 = scmp.ne.s32.totalorder %s175, %s191
      %p193 = scmp.eq.s32.totalorder %s27, 0
      %p194 = por %p192, %p193
      %s195 = ssub.s32 %s28, %s40
      %s196 = ssub.s32 %s29, %s36
      %s197 = sor.u32 %s195, %s196
      %p198 = scmp.eq.s32.totalorder %s197, 0
      %s200 = sadd.s32 %s199, 1
      %s201 = scalar_select %p198, %s199, %s200
      %p204 = pneg %p198
      %p205 = scmp.eq.s32.totalorder %s21, 3
      %p206 = por %p204, %p205
      %p207 = scmp.ne.s32.totalorder %s199, %s202
      %p208 = scmp.eq.s32.totalorder %s21, 0
      %p209 = por %p207, %p208
      %p210 = scmp.ne.s32.totalorder %s199, %s202
      %p211 = scmp.eq.s32.totalorder %s26, 3
      %p212 = por %p210, %p211
      %p213 = scmp.ne.s32.totalorder %s202, %s203
      %p214 = scmp.eq.s32.totalorder %s26, 0
      %p215 = por %p213, %p214
      %p216 = scmp.ne.s32.totalorder %s202, %s203
      %p217 = scmp.eq.s32.totalorder %s27, 3
      %p218 = por %p216, %p217
      %p220 = scmp.ne.s32.totalorder %s203, %s219
      %p221 = scmp.eq.s32.totalorder %s27, 0
      %p222 = por %p220, %p221
      %s223 = ssub.s32 %s28, %s40
      %s224 = ssub.s32 %s29, %s36
      %s225 = sor.u32 %s223, %s224
      %p226 = scmp.eq.s32.totalorder %s225, 0
      %s228 = sadd.s32 %s227, 1
      %s229 = scalar_select %p226, %s227, %s228
      %p232 = pneg %p226
      %p233 = scmp.eq.s32.totalorder %s21, 3
      %p234 = por %p232, %p233
      %p235 = scmp.ne.s32.totalorder %s227, %s230
      %p236 = scmp.eq.s32.totalorder %s21, 0
      %p237 = por %p235, %p236
      %p238 = scmp.ne.s32.totalorder %s227, %s230
      %p239 = scmp.eq.s32.totalorder %s26, 3
      %p240 = por %p238, %p239
      %p241 = scmp.ne.s32.totalorder %s230, %s231
      %p242 = scmp.eq.s32.totalorder %s26, 0
      %p243 = por %p241, %p242
      %p244 = scmp.ne.s32.totalorder %s230, %s231
      %p245 = scmp.eq.s32.totalorder %s27, 3
      %p246 = por %p244, %p245
      %p248 = scmp.ne.s32.totalorder %s231, %s247
      %p249 = scmp.eq.s32.totalorder %s27, 0
      %p250 = por %p248, %p249
      %p251 = scmp.le.s32.totalorder 1, %s21
      %p252 = scmp.lt.s32.totalorder %s21, 5
      %p253 = pnand %p251, %p252
      %p254 = pneg %p253
      // Predicated region
      $region9: #{midas_depth_forward.1} parent=5 // pred_check
        _
      $region10: #{midas_depth_forward.1} parent=5 // pred_check_branch
        %256 = sbr.rel (%p253) target = $region12
      $region11: #{midas_depth_forward.1} parent=5 // pred_region
        %s257 = ssub.s32 %s21, 1
        // Predicated region
        $region13: #{midas_depth_forward.1} parent=11 // pred_check
          %p258 = pneg %p54
        $region14: #{midas_depth_forward.1} parent=11 // pred_check_branch
          %260 = sbr.rel (%p258) target = $region16
        $region15: #{midas_depth_forward.1} parent=11 // pred_region
          %s262 = ssub.s32 16, 16
          %263 = vsyncadd [#allocation5], %s262
          %s265 = sshll.u32 %s0, 4
          %s266 = int_to_ptr.vmem [resolvable:$true] %s265
          %268 = dma.vmem_to_smem %s266, 16, [#allocation3], [#allocation5]
        $region16: #{midas_depth_forward.1} parent=11 // pred_fallthru
          _
        // Predicated region
        $region17: #{midas_depth_forward.1} parent=11 // pred_check
          %p269 = pneg %p75
        $region18: #{midas_depth_forward.1} parent=11 // pred_check_branch
          %271 = sbr.rel (%p269) target = $region20
        $region19: #{midas_depth_forward.1} parent=11 // pred_region
          %s273 = ssub.s32 16, 16
          %274 = vsyncadd [#allocation7], %s273
          %s276 = sshll.u32 %s1, 4
          %s277 = int_to_ptr.vmem [resolvable:$true] %s276
          %279 = dma.vmem_to_smem %s277, 16, [#allocation6], [#allocation7]
        $region20: #{midas_depth_forward.1} parent=11 // pred_fallthru
          _
        // Predicated region
        $region21: #{midas_depth_forward.1} parent=11 // pred_check
          %p280 = pneg %p96
        $region22: #{midas_depth_forward.1} parent=11 // pred_check_branch
          %282 = sbr.rel (%p280) target = $region24
        $region23: #{midas_depth_forward.1} parent=11 // pred_region
          %s284 = ssub.s32 80, 80
          %285 = vsyncadd [#allocation7], %s284
          %s287 = sshll.u32 %s2, 4
          %s288 = int_to_ptr.vmem [resolvable:$true] %s287
          %290 = dma.vmem_to_smem %s288, 80, [#allocation8], [#allocation7]
        $region24: #{midas_depth_forward.1} parent=11 // pred_fallthru
          _
        // Predicated region
        $region25: #{midas_depth_forward.1} parent=11 // pred_check
          %p291 = pneg %p117
        $region26: #{midas_depth_forward.1} parent=11 // pred_check_branch
          %293 = sbr.rel (%p291) target = $region28
        $region27: #{midas_depth_forward.1} parent=11 // pred_region
          %s295 = ssub.s32 16, 16
          %296 = vsyncadd [#allocation10], %s295
          %s298 = sshll.u32 %s3, 4
          %s299 = int_to_ptr.vmem [resolvable:$true] %s298
          %301 = dma.vmem_to_smem %s299, 16, [#allocation9], [#allocation10]
        $region28: #{midas_depth_forward.1} parent=11 // pred_fallthru
          _
        // Predicated region
        $region29: #{midas_depth_forward.1} parent=11 // pred_check
          %p302 = pneg %p138
        $region30: #{midas_depth_forward.1} parent=11 // pred_check_branch
          %304 = sbr.rel (%p302) target = $region32
        $region31: #{midas_depth_forward.1} parent=11 // pred_region
          %s306 = ssub.s32 48, 48
          %307 = vsyncadd [#allocation10], %s306
          %s309 = sshll.u32 %s4, 4
          %s310 = int_to_ptr.vmem [resolvable:$true] %s309
          %312 = dma.vmem_to_smem %s310, 48, [#allocation11], [#allocation10]
        $region32: #{midas_depth_forward.1} parent=11 // pred_fallthru
          _
        // Predicated region
        $region33: #{midas_depth_forward.1} parent=11 // pred_check
          %p313 = pneg %p159
        $region34: #{midas_depth_forward.1} parent=11 // pred_check_branch
          %315 = sbr.rel (%p313) target = $region36
        $region35: #{midas_depth_forward.1} parent=11 // pred_region
          _
        $region36: #{midas_depth_forward.1} parent=11 // pred_fallthru
          _
      $region12: #{midas_depth_forward.1} parent=5 // pred_fallthru
        _
      %p316 = scmp.lt.s32.totalorder %s21, 4
      // Predicated region
      $region37: #{midas_depth_forward.1} parent=5 // pred_check
        %p317 = pneg %p316
      $region38: #{midas_depth_forward.1} parent=5 // pred_check_branch
        %319 = sbr.rel (%p317) target = $region40
      $region39: #{midas_depth_forward.1} parent=5 // pred_region
        // Predicated region
        $region41: #{midas_depth_forward.1} parent=39 // pred_check
          %p320 = pneg %p181
        $region42: #{midas_depth_forward.1} parent=39 // pred_check_branch
          %322 = sbr.rel (%p320) target = $region44
        $region43: #{midas_depth_forward.1} parent=39 // pred_region
          %p323 = scmp.lt.s32.totalorder %s28, 1
          %s324 = scalar_select %p323, %s28, 1
          %p325 = scmp.lt.s32.totalorder %s29, 1
          %s326 = scalar_select %p325, %s29, 1
          %s327 = smul.addr %s326, 2
          %s328 = smul.addr %s324, 4
          %s329 = sadd.s32 %s327, %s328
          %s330 = smul.addr %s329, 8
          %s331 = scalar_lea.vmem %s6, %s330
        $region44: #{midas_depth_forward.1} parent=39 // pred_fallthru
          _
        // Predicated region
        $region45: #{midas_depth_forward.1} parent=39 // pred_check
          %p332 = pneg %p209
        $region46: #{midas_depth_forward.1} parent=39 // pred_check_branch
          %334 = sbr.rel (%p332) target = $region48
        $region47: #{midas_depth_forward.1} parent=39 // pred_region
          %p335 = scmp.lt.s32.totalorder %s28, 1
          %s336 = scalar_select %p335, %s28, 1
          %p337 = scmp.lt.s32.totalorder %s29, 1
          %s338 = scalar_select %p337, %s29, 1
          %s339 = smul.addr %s338, 2
          %s340 = smul.addr %s336, 4
          %s341 = sadd.s32 %s339, %s340
          %s342 = smul.addr %s341, 8
          %s343 = scalar_lea.vmem %s7, %s342
        $region48: #{midas_depth_forward.1} parent=39 // pred_fallthru
          _
      $region40: #{midas_depth_forward.1} parent=5 // pred_fallthru
        _
      %p344 = scmp.le.s32.totalorder 1, %s21
      %p345 = scmp.lt.s32.totalorder %s21, 5
      %p346 = pnand %p344, %p345
      %p347 = pneg %p346
      // Predicated region
      $region49: #{midas_depth_forward.1} parent=5 // pred_check
        _
      $region50: #{midas_depth_forward.1} parent=5 // pred_check_branch
        %349 = sbr.rel (%p346) target = $region52
      $region51: #{midas_depth_forward.1} parent=5 // pred_region
        %s350 = ssub.s32 %s21, 1
        // Predicated region
        $region53: #{midas_depth_forward.1} parent=51 // pred_check
          %p351 = pneg %p54
        $region54: #{midas_depth_forward.1} parent=51 // pred_check_branch
          %353 = sbr.rel (%p351) target = $region56
        $region55: #{midas_depth_forward.1} parent=51 // pred_region
          %354 = dma.done [#allocation5], 16
        $region56: #{midas_depth_forward.1} parent=51 // pred_fallthru
          _
        // Predicated region
        $region57: #{midas_depth_forward.1} parent=51 // pred_check
          %p355 = pneg %p75
        $region58: #{midas_depth_forward.1} parent=51 // pred_check_branch
          %357 = sbr.rel (%p355) target = $region60
        $region59: #{midas_depth_forward.1} parent=51 // pred_region
          %358 = dma.done [#allocation7], 16
        $region60: #{midas_depth_forward.1} parent=51 // pred_fallthru
          _
        // Predicated region
        $region61: #{midas_depth_forward.1} parent=51 // pred_check
          %p359 = pneg %p96
        $region62: #{midas_depth_forward.1} parent=51 // pred_check_branch
          %361 = sbr.rel (%p359) target = $region64
        $region63: #{midas_depth_forward.1} parent=51 // pred_region
          %362 = dma.done [#allocation7], 80
        $region64: #{midas_depth_forward.1} parent=51 // pred_fallthru
          _
        // Predicated region
        $region65: #{midas_depth_forward.1} parent=51 // pred_check
          %p363 = pneg %p117
        $region66: #{midas_depth_forward.1} parent=51 // pred_check_branch
          %365 = sbr.rel (%p363) target = $region68
        $region67: #{midas_depth_forward.1} parent=51 // pred_region
          %366 = dma.done [#allocation10], 16
        $region68: #{midas_depth_forward.1} parent=51 // pred_fallthru
          _
        // Predicated region
        $region69: #{midas_depth_forward.1} parent=51 // pred_check
          %p367 = pneg %p138
        $region70: #{midas_depth_forward.1} parent=51 // pred_check_branch
          %369 = sbr.rel (%p367) target = $region72
        $region71: #{midas_depth_forward.1} parent=51 // pred_region
          %370 = dma.done [#allocation10], 48
        $region72: #{midas_depth_forward.1} parent=51 // pred_fallthru
          _
        %371 = sfence
        %p372 = pneg %p54
        %p373 = pneg %p51
        %p374 = pneg %p75
        %p375 = pneg %p72
        %p376 = pneg %p96
        %p377 = pneg %p93
        %p378 = pneg %p117
        %p379 = pneg %p114
        %p380 = pneg %p138
        %p381 = pneg %p135
        %p382 = pneg %p159
        %p383 = pneg %p156
        %p384 = scmp.lt.s32.totalorder %s30, 1
        %s385 = scalar_select %p384, %s30, 1
        %p386 = scmp.lt.s32.totalorder %s31, 1
        %s387 = scalar_select %p386, %s31, 1
        %s388 = smul.addr %s387, 2
        %s389 = smul.addr %s385, 4
        %s390 = sadd.s32 %s388, %s389
        %s391 = smul.addr %s390, 8
        %s392 = scalar_lea.vmem %s6, %s391
        %p393 = pneg %p187
        %p394 = pneg %p184
        %p395 = scmp.lt.s32.totalorder %s30, 1
        %s396 = scalar_select %p395, %s30, 1
        %p397 = scmp.lt.s32.totalorder %s31, 1
        %s398 = scalar_select %p397, %s31, 1
        %s399 = smul.addr %s398, 2
        %s400 = smul.addr %s396, 4
        %s401 = sadd.s32 %s399, %s400
        %s402 = smul.addr %s401, 8
        %s403 = scalar_lea.vmem %s7, %s402
        %p404 = pneg %p215
        %p405 = pneg %p212
        %p406 = pneg %p243
        %p407 = pneg %p240
        %s408 = sand.u32 %s230, 1
        %s409 = scalar_lea.sflag [#allocation4], %s408
        %s410 = sand.u32 %s230, 1
        %s411 = smul.addr %s410, 8
        %s412 = scalar_lea.vmem [#allocation12], %s411
        %p413 = scmp.lt.s32.totalorder %s30, 1
        %s414 = scalar_select %p413, %s30, 1
        %p415 = scmp.lt.s32.totalorder %s31, 1
        %s416 = scalar_select %p415, %s31, 1
        %s417 = smul.addr %s416, 2
        %s418 = smul.addr %s414, 4
        %s419 = sadd.s32 %s417, %s418
        %s420 = smul.addr %s419, 8
        %s421 = scalar_lea.vmem %s6, %s420
        %p422 = scmp.lt.s32.totalorder %s30, 1
        %s423 = scalar_select %p422, %s30, 1
        %p424 = scmp.lt.s32.totalorder %s31, 1
        %s425 = scalar_select %p424, %s31, 1
        %s426 = smul.addr %s425, 2
        %s427 = smul.addr %s423, 4
        %s428 = sadd.s32 %s426, %s427
        %s429 = smul.addr %s428, 8
        %s430 = scalar_lea.vmem %s7, %s429
        %s431 = sld [smem:[#allocation3 + %s30]]
        %s432 = sld [smem:[#allocation6 + %s30]]
        %v433 = vld [vmem:[%s421] sm:$0xff]
        %v434 = vld [vmem:[%s421 + $0x8] sm:$0xf]
        %v435 = vstv %s431
        %v436 = vsub.f32 %v433, %v435
        %v437 = vsub.f32 %v434, %v435
        %v438 = vstv %s432
        %v439 = vrcp.pop %v438
        %v440 = vmul.f32 %v436, %v439
        %v441 = vmul.f32 %v437, %v439
        %v442 = vadd.f32 %v440, 0.14
        %v443 = vadd.f32 %v441, 0.14
        %v444 = vrcp.pop %v442
        %v445 = vmul.f32 1.0, %v444
        %v446 = vrcp.pop %v443
        %v447 = vmul.f32 1.0, %v446
        %v448 = vlaneseq
        %v449 = vshrl.u32 %v448, 7
        %v450 = vadd.s32 %v449, 8
        %s451 = smul.u32 %s31, 8
        %s452 = ssub.s32 %s451, 2
        %v453 = vstv %s452
        %v454 = vadd.s32 %v449, %v453
        %v455 = vadd.s32 %v450, %v453
        %vm456 = vcmp.ge.s32.totalorder %v454, 0
        %vm457 = vcmp.ge.s32.totalorder %v455, 0
        %vm458 = vcmp.lt.s32.totalorder %v454, 16
        %vm459 = vcmp.lt.s32.totalorder %v455, 16
        %vm460 = vmand %vm456, %vm458
        %vm461 = vmand %vm457, %vm459
        %v462 = vsel %vm460, 1, 0
        %v463 = vsel %vm461, 1, 0
        %vm464 = vcmp.eq.s32.totalorder %v462, 1
        %vm465 = vcmp.eq.s32.totalorder %v463, 1
        %v466 = vsel %vm464, %v445, 0.0
        %v467 = vsel %vm465, %v447, 0.0
        %v468 = vld [vmem:[%s430] sm:$0xff]
        %v469 = vld [vmem:[%s430 + $0x8] sm:$0xf]
        %472 = vrot.lane.b32.xlu0 %v466, 1
        %v473 = vpop.permute.xlu0 %472
        %474 = vrot.lane.b32.xlu0 %v467, 1
        %v475 = vpop.permute.xlu0 %474
        %vm478 = vcmask 7168
        %v479 = vsel %vm478, 0.0, %v473
        %v480 = vsel %vm478, 0.0, %v475
        %481 = vrot.lane.b32.xlu0 %v466, 127
        %v482 = vpop.permute.xlu0 %481
        %483 = vrot.lane.b32.xlu0 %v467, 127
        %v484 = vpop.permute.xlu0 %483
        %vm487 = vcmask 121856
        %v488 = vsel %vm487, %v482, 0.0
        %v489 = vsel %vm487, %v484, 0.0
        %492 = vrot.lane.b32.xlu0 %v468, 1
        %v493 = vpop.permute.xlu0 %492
        %494 = vrot.lane.b32.xlu0 %v469, 1
        %v495 = vpop.permute.xlu0 %494
        %v498 = vsel %vm478, 0.0, %v493
        %v499 = vsel %vm478, 0.0, %v495
        %500 = vrot.lane.b32.xlu0 %v468, 127
        %v501 = vpop.permute.xlu0 %500
        %502 = vrot.lane.b32.xlu0 %v469, 127
        %v503 = vpop.permute.xlu0 %502
        %v506 = vsel %vm487, %v501, 0.0
        %v507 = vsel %vm487, %v503, 0.0
        %s508 = ssub.s32 %s451, 1
        %v509 = vstv %s508
        %v510 = vadd.s32 %v449, %v509
        %v511 = vadd.s32 %v450, %v509
        %vm512 = vcmp.ge.s32.totalorder %v510, 0
        %vm513 = vcmp.ge.s32.totalorder %v511, 0
        %vm514 = vcmp.lt.s32.totalorder %v510, 16
        %vm515 = vcmp.lt.s32.totalorder %v511, 16
        %vm516 = vmand %vm512, %vm514
        %vm517 = vmand %vm513, %vm515
        loop: start=0, step=1, limit=32
        $region73: #{midas_depth_forward.1} parent=51 // loop_pre_header
          _
        $region74: #{midas_depth_forward.1} parent=51 // loop_header
          %s519 = sphi 0, %s523
          %p520 = scmp.ge.s32.totalorder %s519, 32
          %v524 = vphi 0.0, %v853
        $region75: #{midas_depth_forward.1} parent=51 // loop_header_branch
          %522 = sbr.rel (%p520) target = $region79
        $region76: #{midas_depth_forward.1} parent=51 // loop_body
          %s525 = smul.u32 %s519, 18
          %s526 = sld [smem:[#allocation8 + %s525]]
          %v527 = vstv %s526
          %v528 = vmul.f32 %v527, %v479
          %v529 = vmul.f32 %v527, %v480
          %v530 = vadd.f32 %v528, 0.0
          %v531 = vadd.f32 %v529, 0.0
          %s532 = sadd.s32 %s525, 1
          %s533 = sld [smem:[#allocation8 + %s532]]
          %v534 = vstv %s533
          %v535 = vmul.f32 %v534, %v466
          %v536 = vmul.f32 %v534, %v467
          %v537 = vadd.f32 %v530, %v535
          %v538 = vadd.f32 %v531, %v536
          %s539 = sadd.s32 %s525, 2
          %s540 = sld [smem:[#allocation8 + %s539]]
          %v541 = vstv %s540
          %v542 = vmul.f32 %v541, %v488
          %v543 = vmul.f32 %v541, %v489
          %v544 = vadd.f32 %v537, %v542
          %v545 = vadd.f32 %v538, %v543
          %s546 = sadd.s32 %s525, 3
          %s547 = sld [smem:[#allocation8 + %s546]]
          %v548 = vstv %s547
          %v549 = vmul.f32 %v548, %v479
          %v550 = vmul.f32 %v548, %v480
          %vm553 = vcmask 1046528
          %v554 = vrot.slane %v549, 1
          %v555 = vrot.slane %v550, 1
          %v556 = vsel %vm553, %v554, %v555
          %v559 = vadd.f32 %v544, %v556
          %v560 = vadd.f32 %v545, %v555
          %s561 = sadd.s32 %s525, 4
          %s562 = sld [smem:[#allocation8 + %s561]]
          %v563 = vstv %s562
          %v564 = vmul.f32 %v563, %v466
          %v565 = vmul.f32 %v563, %v467
          %v568 = vrot.slane %v564, 1
          %v569 = vrot.slane %v565, 1
          %v570 = vsel %vm553, %v568, %v569
          %v573 = vadd.f32 %v559, %v570
          %v574 = vadd.f32 %v560, %v569
          %s575 = sadd.s32 %s525, 5
          %s576 = sld [smem:[#allocation8 + %s575]]
          %v577 = vstv %s576
          %v578 = vmul.f32 %v577, %v488
          %v579 = vmul.f32 %v577, %v489
          %v582 = vrot.slane %v578, 1
          %v583 = vrot.slane %v579, 1
          %v584 = vsel %vm553, %v582, %v583
          %v587 = vadd.f32 %v573, %v584
          %v588 = vadd.f32 %v574, %v583
          %s589 = sadd.s32 %s525, 6
          %s590 = sld [smem:[#allocation8 + %s589]]
          %v591 = vstv %s590
          %v592 = vmul.f32 %v591, %v479
          %v593 = vmul.f32 %v591, %v480
          %vm596 = vcmask 1045504
          %v597 = vrot.slane %v592, 2
          %v598 = vrot.slane %v593, 2
          %v599 = vsel %vm596, %v597, %v598
          %v602 = vadd.f32 %v587, %v599
          %v603 = vadd.f32 %v588, %v598
          %s604 = sadd.s32 %s525, 7
          %s605 = sld [smem:[#allocation8 + %s604]]
          %v606 = vstv %s605
          %v607 = vmul.f32 %v606, %v466
          %v608 = vmul.f32 %v606, %v467
          %v611 = vrot.slane %v607, 2
          %v612 = vrot.slane %v608, 2
          %v613 = vsel %vm596, %v611, %v612
          %v616 = vadd.f32 %v602, %v613
          %v617 = vadd.f32 %v603, %v612
          %s618 = sadd.s32 %s525, 8
          %s619 = sld [smem:[#allocation8 + %s618]]
          %v620 = vstv %s619
          %v621 = vmul.f32 %v620, %v488
          %v622 = vmul.f32 %v620, %v489
          %v625 = vrot.slane %v621, 2
          %v626 = vrot.slane %v622, 2
          %v627 = vsel %vm596, %v625, %v626
          %v630 = vadd.f32 %v616, %v627
          %v631 = vadd.f32 %v617, %v626
          %s632 = sadd.s32 %s525, 9
          %s633 = sld [smem:[#allocation8 + %s632]]
          %v634 = vstv %s633
          %v635 = vmul.f32 %v634, %v498
          %v636 = vmul.f32 %v634, %v499
          %v637 = vadd.f32 %v630, %v635
          %v638 = vadd.f32 %v631, %v636
          %s639 = sadd.s32 %s525, 10
          %s640 = sld [smem:[#allocation8 + %s639]]
          %v641 = vstv %s640
          %v642 = vmul.f32 %v641, %v468
          %v643 = vmul.f32 %v641, %v469
          %v644 = vadd.f32 %v637, %v642
          %v645 = vadd.f32 %v638, %v643
          %s646 = sadd.s32 %s525, 11
          %s647 = sld [smem:[#allocation8 + %s646]]
          %v648 = vstv %s647
          %v649 = vmul.f32 %v648, %v506
          %v650 = vmul.f32 %v648, %v507
          %v651 = vadd.f32 %v644, %v649
          %v652 = vadd.f32 %v645, %v650
          %s653 = sadd.s32 %s525, 12
          %s654 = sld [smem:[#allocation8 + %s653]]
          %v655 = vstv %s654
          %v656 = vmul.f32 %v655, %v498
          %v657 = vmul.f32 %v655, %v499
          %v660 = vrot.slane %v656, 1
          %v661 = vrot.slane %v657, 1
          %v662 = vsel %vm553, %v660, %v661
          %v665 = vadd.f32 %v651, %v662
          %v666 = vadd.f32 %v652, %v661
          %s667 = sadd.s32 %s525, 13
          %s668 = sld [smem:[#allocation8 + %s667]]
          %v669 = vstv %s668
          %v670 = vmul.f32 %v669, %v468
          %v671 = vmul.f32 %v669, %v469
          %v674 = vrot.slane %v670, 1
          %v675 = vrot.slane %v671, 1
          %v676 = vsel %vm553, %v674, %v675
          %v679 = vadd.f32 %v665, %v676
          %v680 = vadd.f32 %v666, %v675
          %s681 = sadd.s32 %s525, 14
          %s682 = sld [smem:[#allocation8 + %s681]]
          %v683 = vstv %s682
          %v684 = vmul.f32 %v683, %v506
          %v685 = vmul.f32 %v683, %v507
          %v688 = vrot.slane %v684, 1
          %v689 = vrot.slane %v685, 1
          %v690 = vsel %vm553, %v688, %v689
          %v693 = vadd.f32 %v679, %v690
          %v694 = vadd.f32 %v680, %v689
          %s695 = sadd.s32 %s525, 15
          %s696 = sld [smem:[#allocation8 + %s695]]
          %v697 = vstv %s696
          %v698 = vmul.f32 %v697, %v498
          %v699 = vmul.f32 %v697, %v499
          %v702 = vrot.slane %v698, 2
          %v703 = vrot.slane %v699, 2
          %v704 = vsel %vm596, %v702, %v703
          %v707 = vadd.f32 %v693, %v704
          %v708 = vadd.f32 %v694, %v703
          %s709 = sadd.s32 %s525, 16
          %s710 = sld [smem:[#allocation8 + %s709]]
          %v711 = vstv %s710
          %v712 = vmul.f32 %v711, %v468
          %v713 = vmul.f32 %v711, %v469
          %v716 = vrot.slane %v712, 2
          %v717 = vrot.slane %v713, 2
          %v718 = vsel %vm596, %v716, %v717
          %v721 = vadd.f32 %v707, %v718
          %v722 = vadd.f32 %v708, %v717
          %s723 = sadd.s32 %s525, 17
          %s724 = sld [smem:[#allocation8 + %s723]]
          %v725 = vstv %s724
          %v726 = vmul.f32 %v725, %v506
          %v727 = vmul.f32 %v725, %v507
          %v730 = vrot.slane %v726, 2
          %v731 = vrot.slane %v727, 2
          %v732 = vsel %vm596, %v730, %v731
          %v735 = vadd.f32 %v721, %v732
          %v736 = vadd.f32 %v722, %v731
          %s737 = sld [smem:[#allocation9 + %s519]]
          %v738 = vstv %s737
          %v739 = vadd.f32 %v735, %v738
          %v740 = vadd.f32 %v736, %v738
          %v741 = vmax.f32 %v739, 0.0
          %v742 = vmax.f32 %v740, 0.0
          %v743 = vsel %vm516, 1, 0
          %v744 = vsel %vm517, 1, 0
          %vm745 = vcmp.eq.s32.totalorder %v743, 1
          %vm746 = vcmp.eq.s32.totalorder %v744, 1
          %v747 = vsel %vm745, %v741, 0.0
          %v748 = vsel %vm746, %v742, 0.0
          %751 = vrot.lane.b32.xlu0 %v747, 1
          %v752 = vpop.permute.xlu0 %751
          %753 = vrot.lane.b32.xlu0 %v748, 1
          %v754 = vpop.permute.xlu0 %753
          %v757 = vsel %vm478, 0.0, %v752
          %v758 = vsel %vm478, 0.0, %v754
          %759 = vrot.lane.b32.xlu0 %v747, 127
          %v760 = vpop.permute.xlu0 %759
          %761 = vrot.lane.b32.xlu0 %v748, 127
          %v762 = vpop.permute.xlu0 %761
          %v765 = vsel %vm487, %v760, 0.0
          %v766 = vsel %vm487, %v762, 0.0
          %s767 = smul.u32 %s519, 9
          %s768 = sld [smem:[#allocation11 + %s767]]
          %v769 = vstv %s768
          %v770 = vmul.f32 %v769, %v757
          %v771 = vadd.f32 %v524, %v770
          %s772 = sadd.s32 %s767, 1
          %s773 = sld [smem:[#allocation11 + %s772]]
          %v774 = vstv %s773
          %v775 = vmul.f32 %v774, %v747
          %v776 = vadd.f32 %v771, %v775
          %s777 = sadd.s32 %s767, 2
          %s778 = sld [smem:[#allocation11 + %s777]]
          %v779 = vstv %s778
          %v780 = vmul.f32 %v779, %v765
          %v781 = vadd.f32 %v776, %v780
          %s782 = sadd.s32 %s767, 3
          %s783 = sld [smem:[#allocation11 + %s782]]
          %v784 = vstv %s783
          %v785 = vmul.f32 %v784, %v757
          %v786 = vmul.f32 %v784, %v758
          %v789 = vrot.slane %v785, 1
          %v790 = vrot.slane %v786, 1
          %v791 = vsel %vm553, %v789, %v790
          %v793 = vadd.f32 %v781, %v791
          %s794 = sadd.s32 %s767, 4
          %s795 = sld [smem:[#allocation11 + %s794]]
          %v796 = vstv %s795
          %v797 = vmul.f32 %v796, %v747
          %v798 = vmul.f32 %v796, %v748
          %v801 = vrot.slane %v797, 1
          %v802 = vrot.slane %v798, 1
          %v803 = vsel %vm553, %v801, %v802
          %v805 = vadd.f32 %v793, %v803
          %s806 = sadd.s32 %s767, 5
          %s807 = sld [smem:[#allocation11 + %s806]]
          %v808 = vstv %s807
          %v809 = vmul.f32 %v808, %v765
          %v810 = vmul.f32 %v808, %v766
          %v813 = vrot.slane %v809, 1
          %v814 = vrot.slane %v810, 1
          %v815 = vsel %vm553, %v813, %v814
          %v817 = vadd.f32 %v805, %v815
          %s818 = sadd.s32 %s767, 6
          %s819 = sld [smem:[#allocation11 + %s818]]
          %v820 = vstv %s819
          %v821 = vmul.f32 %v820, %v757
          %v822 = vmul.f32 %v820, %v758
          %v825 = vrot.slane %v821, 2
          %v826 = vrot.slane %v822, 2
          %v827 = vsel %vm596, %v825, %v826
          %v829 = vadd.f32 %v817, %v827
          %s830 = sadd.s32 %s767, 7
          %s831 = sld [smem:[#allocation11 + %s830]]
          %v832 = vstv %s831
          %v833 = vmul.f32 %v832, %v747
          %v834 = vmul.f32 %v832, %v748
          %v837 = vrot.slane %v833, 2
          %v838 = vrot.slane %v834, 2
          %v839 = vsel %vm596, %v837, %v838
          %v841 = vadd.f32 %v829, %v839
          %s842 = sadd.s32 %s767, 8
          %s843 = sld [smem:[#allocation11 + %s842]]
          %v844 = vstv %s843
          %v845 = vmul.f32 %v844, %v765
          %v846 = vmul.f32 %v844, %v766
          %v849 = vrot.slane %v845, 2
          %v850 = vrot.slane %v846, 2
          %v851 = vsel %vm596, %v849, %v850
          %v853 = vadd.f32 %v841, %v851
        $region77: #{midas_depth_forward.1} parent=51 // loop_footer
          %s523 = sadd.s32 1, %s519
        $region78: #{midas_depth_forward.1} parent=51 // loop_footer_branch
          %518 = sbr.rel target = $region74
        $region79: #{midas_depth_forward.1} parent=51 // loop_exit
          _
        %s854 = sld [smem:[#allocation2]]
        %v855 = vstv %s854
        %v856 = vadd.f32 %v524, %v855
        %vm857 = vcmask 130048
        %858 = vst.msk [vmem:[%s412] sm:$0xff] %vm857, %v856
        %s859 = sand.u32 %s230, 1
        %s860 = scalar_lea.sflag [#allocation4], %s859
        %s861 = sand.u32 %s230, 1
        %s862 = smul.addr %s861, 8
        %s863 = scalar_lea.vmem [#allocation12], %s862
        // Predicated region
        $region80: #{midas_depth_forward.1} parent=51 // pred_check
          %p864 = pneg %p240
        $region81: #{midas_depth_forward.1} parent=51 // pred_check_branch
          %866 = sbr.rel (%p864) target = $region83
        $region82: #{midas_depth_forward.1} parent=51 // pred_region
          %s868 = ssub.s32 128, 128
          %869 = vsyncadd %s860, %s868
          %s870 = smul.addr %s30, 2
          %s871 = sadd.s32 %s31, %s870
          %s872 = smul.addr %s871, 128
          %s873 = scalar_lea.hbm %s8, %s872
          %s875 = sshll.u32 %s863, 4
          %s876 = int_to_ptr.vmem [resolvable:$true] %s875
          %878 = dma.vmem_to_hbm [thread:$0]  %s876, 128, %s873, %s860
        $region83: #{midas_depth_forward.1} parent=51 // pred_fallthru
          _
      $region52: #{midas_depth_forward.1} parent=5 // pred_fallthru
        _
      %p879 = scmp.le.s32.totalorder 2, %s21
      // Predicated region
      $region84: #{midas_depth_forward.1} parent=5 // pred_check
        %p880 = pneg %p879
      $region85: #{midas_depth_forward.1} parent=5 // pred_check_branch
        %882 = sbr.rel (%p880) target = $region87
      $region86: #{midas_depth_forward.1} parent=5 // pred_region
        %s883 = ssub.s32 %s21, 2
        // Predicated region
        $region88: #{midas_depth_forward.1} parent=86 // pred_check
          %p884 = pneg %p246
        $region89: #{midas_depth_forward.1} parent=86 // pred_check_branch
          %886 = sbr.rel (%p884) target = $region91
        $region90: #{midas_depth_forward.1} parent=86 // pred_region
          %s887 = sand.u32 %s231, 1
          %s888 = scalar_lea.sflag [#allocation4], %s887
          %s889 = sand.u32 %s231, 1
          %s890 = smul.addr %s889, 8
          %s891 = scalar_lea.vmem [#allocation12], %s890
          %892 = dma.done %s888, 128
        $region91: #{midas_depth_forward.1} parent=86 // pred_fallthru
          _
      $region87: #{midas_depth_forward.1} parent=5 // pred_fallthru
        _
    $region6: #{midas_depth_forward.1} parent=1 // loop_footer
      %s25 = sadd.s32 1, %s21
    $region7: #{midas_depth_forward.1} parent=1 // loop_footer_branch
      %20 = sbr.rel target = $region3
    $region8: #{midas_depth_forward.1} parent=1 // loop_exit
      _
    %893 = vsyncpa [#allocation4], 1
    %s894 = scalar_lea.sflag [#allocation4], 1
    %895 = vsyncpa %s894, 1
    %896 = vsyncpa [#allocation5], 1
    %s897 = scalar_lea.sflag [#allocation5], 1
    %898 = vsyncpa %s897, 1
    %899 = vsyncpa [#allocation7], 1
    %900 = vsyncpa [#allocation10], 1

</llo_original>
